<compile_context>
chip_gen: v7x
topology: tpu7x:2x2x1
jax: 0.10.0
libtpu: 0.0.40
codegen_flags: <defaults>
</compile_context>

<pallas_src>
import functools
import math

import jax
import jax.numpy as jnp
from jax import lax
from jax.experimental import pallas as pl
from jax.experimental.pallas import tpu as pltpu


_MIN_PALLAS_BYTES = 1 << 20  # below this, a fused XLA reduce beats kernel overhead


def _round_up(x, m):
    return ((x + m - 1) // m) * m


def _largest_divisor_leq(n, cap):
    cap = max(1, min(n, cap))
    for d in range(cap, 0, -1):
        if n % d == 0:
            return d
    return 1


def _vmem_capacity_bytes():
    try:
        info = pltpu.get_tpu_info()
        cap = getattr(info, "vmem_capacity_bytes", None)
        if cap:
            return int(cap)
    except Exception:
        pass
    return 64 << 20  # conservative default (v7x-sized)


def _budgets():
    """(per-block budget, vmem_limit cap, small-VMEM/megacore flag)."""
    cap = _vmem_capacity_bytes()
    if cap >= (96 << 20):            # v5e / v6e: 128 MiB physical VMEM
        return (16 << 20), (96 << 20), False
    # v7x-sized (64 MiB) or unknown: small blocks, generous headroom, 2 TCs.
    return (6 << 20), (48 << 20), True


# --------------------------------------------------------------------------
# Kernels
# --------------------------------------------------------------------------
def _mean_pool_single_kernel(h_ref, o_ref, *, inv_n):
    """Whole pooled axis resident in the block: mean in one pass, no scratch."""
    x = h_ref[...].astype(jnp.float32)
    o_ref[...] = (jnp.sum(x, axis=1, keepdims=True) * inv_n).astype(o_ref.dtype)


def _mean_pool_chunked_kernel(h_ref, o_ref, acc_ref, *, inv_n, n_rows, chunk,
                              needs_mask):
    """Accumulate partial sums over the pooled (sublane) axis; finalize w/ 1/N."""
    k = pl.program_id(2)                      # reduction axis is last in the grid
    last = pl.num_programs(2) - 1

    @pl.when(k == 0)
    def _init():
        acc_ref[...] = jnp.zeros_like(acc_ref)

    def _accumulate(masked):
        x = h_ref[...].astype(jnp.float32)
        if masked:
            row = k * chunk + lax.broadcasted_iota(jnp.int32, x.shape, 1)
            x = jnp.where(row < n_rows, x, 0.0)
        tb, acc_rows, td = acc_ref.shape
        # Sublane-group partial sums: hot-loop work is elementwise VPU adds;
        # the cross-sublane (XLU) reduce is deferred to the finalize branch.
        acc_ref[...] += jnp.sum(x.reshape(tb, chunk // acc_rows, acc_rows, td),
                                axis=1)

    if needs_mask:
        # Mask ONLY the trailing partial block; all other steps stay mask-free.
        @pl.when(k == last)
        def _tail():
            _accumulate(True)

        @pl.when(k != last)
        def _body():
            _accumulate(False)
    else:
        _accumulate(False)

    @pl.when(k == last)
    def _finalize():
        total = jnp.sum(acc_ref[...], axis=1, keepdims=True)
        o_ref[...] = (total * inv_n).astype(o_ref.dtype)


# --------------------------------------------------------------------------
# Tiling
# --------------------------------------------------------------------------
def _select_tiles(B, N, D, itemsize, pack, block_budget):
    """Pick (tb, chunk, td) using the PADDED (8/pack,128) footprint, or None."""
    lane = lambda t: _round_up(t, 128)

    def blk_bytes(tb, rows, td):
        return tb * _round_up(max(rows, 1), pack) * lane(td) * itemsize

    # Preferred: whole pooled axis resident (no accumulator, no extra passes).
    rows_b = _round_up(N, pack) * itemsize            # bytes per (tb=1, 128-lane) col
    td = D
    if D % 128 == 0:
        td = 128 * _largest_divisor_leq(D // 128,
                                        max(1, block_budget // (rows_b * 128)))
    if rows_b * lane(td) <= block_budget:
        tb = _largest_divisor_leq(B, max(1, block_budget // (rows_b * lane(td))))
        return tb, N, td

    # Otherwise: chunk the pooled axis in multiples of the sublane pack.
    td = D
    if blk_bytes(1, pack, td) > block_budget and D % 128 == 0:
        td = 128 * _largest_divisor_leq(
            D // 128, max(1, block_budget // (pack * 128 * itemsize)))
    if blk_bytes(1, pack, td) > block_budget:
        return None                                    # pathological -> XLA fallback
    chunk_cap = (block_budget // (lane(td) * itemsize)) // pack * pack
    chunk = min((N // pack) * pack, max(pack, chunk_cap))
    return 1, chunk, td


def _ensure_two_parallel_blocks(B, D, tb, td):
    """v7x megacore: make sure both TensorCores get at least one block."""
    if (B // tb) * (D // td) >= 2:
        return tb, td
    if B >= 2:
        return _largest_divisor_leq(B, B // 2), td
    if td % 256 == 0:
        return tb, td // 2
    return tb, td


# --------------------------------------------------------------------------
# Pallas dispatch on a canonical (B, N, D) view (pool over axis 1)
# --------------------------------------------------------------------------
def _mean_pool_3d(h3, out_dtype, block_budget, vmem_cap, split_for_megacore):
    B, N, D = h3.shape
    itemsize = jnp.dtype(h3.dtype).itemsize
    out_itemsize = jnp.dtype(out_dtype).itemsize
    pack = max(8, 32 // itemsize)                      # sublane rows per vreg

    tiles = _select_tiles(B, N, D, itemsize, pack, block_budget)
    if tiles is None:
        return None
    tb, chunk, td = tiles
    if split_for_megacore:
        tb, td = _ensure_two_parallel_blocks(B, D, tb, td)

    nb, nd = B // tb, D // td
    lane_td = _round_up(td, 128)
    in_blk = tb * _round_up(chunk, pack) * lane_td * itemsize
    out_blk = tb * 32 * lane_td                        # (tb,1,td) padded, any dtype<=4B
    inv_n = 1.0 / N                                    # plain Python float (not traced)

    cost = pl.CostEstimate(flops=B * N * D, transcendentals=0,
                           bytes_accessed=B * N * D * itemsize + B * D * out_itemsize)

    if chunk == N:
        # ---- fast path: single reduction block, no accumulator scratch ----
        needed = 2 * in_blk + 2 * out_blk
        vmem_limit = int(min(max(needed + (8 << 20), 32 << 20), vmem_cap))
        kernel = functools.partial(_mean_pool_single_kernel, inv_n=inv_n)
        return pl.pallas_call(
            kernel,
            out_shape=jax.ShapeDtypeStruct((B, 1, D), out_dtype),
            grid_spec=pltpu.PrefetchScalarGridSpec(
                num_scalar_prefetch=0,
                grid=(nb, nd),
                in_specs=[pl.BlockSpec((tb, N, td), lambda b, d: (b, 0, d))],
                out_specs=pl.BlockSpec((tb, 1, td), lambda b, d: (b, 0, d)),
            ),
            compiler_params=pltpu.CompilerParams(
                dimension_semantics=("parallel", "parallel"),
                vmem_limit_bytes=vmem_limit,
            ),
            cost_estimate=cost,
        )(h3)

    # ---- chunked reduction with a resident fp32 accumulator ----
    nk = pl.cdiv(N, chunk)
    needs_mask = (N % chunk) != 0
    acc_bytes = tb * 8 * lane_td * 4
    needed = 2 * in_blk + 2 * out_blk + acc_bytes
    vmem_limit = int(min(max(needed + (8 << 20), 32 << 20), vmem_cap))
    kernel = functools.partial(
        _mean_pool_chunked_kernel,
        inv_n=inv_n, n_rows=N, chunk=chunk, needs_mask=needs_mask)
    return pl.pallas_call(
        kernel,
        out_shape=jax.ShapeDtypeStruct((B, 1, D), out_dtype),
        grid_spec=pltpu.PrefetchScalarGridSpec(
            num_scalar_prefetch=0,
            grid=(nb, nd, nk),                         # reduction axis last
            in_specs=[pl.BlockSpec((tb, chunk, td), lambda b, d, k: (b, k, d))],
            out_specs=pl.BlockSpec((tb, 1, td), lambda b, d, k: (b, 0, d)),
            scratch_shapes=[pltpu.VMEM((tb, 8, td), jnp.float32)],
        ),
        compiler_params=pltpu.CompilerParams(
            dimension_semantics=("parallel", "parallel", "arbitrary"),
            vmem_limit_bytes=vmem_limit,
        ),
        cost_estimate=cost,
    )(h3)


# --------------------------------------------------------------------------
# Public wrapper (MeanPooling.forward equivalent)
# --------------------------------------------------------------------------
def mean_pooling(h, x_context=None, x_target=None, *, pooling_dim=0,
                 min_pallas_bytes=_MIN_PALLAS_BYTES, block_budget_bytes=None):
    """JAX/Pallas equivalent of MeanPooling(pooling_dim).forward(h, xc, xt)."""
    del x_context, x_target                 # unused, as in the PyTorch module
    h = jnp.asarray(h)
    pd = pooling_dim % h.ndim
    shape = h.shape
    out_shape = shape[:pd] + (1,) + shape[pd + 1:]

    B = math.prod(shape[:pd])               # leading dims -> batch axis
    N = shape[pd]                           # pooled axis
    D = math.prod(shape[pd + 1:])           # trailing dims -> lane axis
    itemsize = jnp.dtype(h.dtype).itemsize

    # Tiny inputs: fixed pallas_call/grid overhead dominates; use fused XLA.
    if h.size * itemsize < min_pallas_bytes or N <= 1:
        return jnp.mean(h, axis=pd, keepdims=True)

    block_budget, vmem_cap, small_vmem = _budgets()
    if block_budget_bytes is not None:
        block_budget = int(block_budget_bytes)

    # Lane-dense fold for narrow trailing width: with D < 128 every vreg /
    # (8,128) tile is only D/128 occupied, so fold g pooled rows into the lane
    # axis (zero-copy reshape) and finish the tiny g-way mean outside.
    g = 1
    if D < 128:
        g = _largest_divisor_leq(N, max(1, 128 // D))
    if g > 1:
        h3 = h.reshape(B, N // g, g * D)
        out3 = _mean_pool_3d(h3, jnp.float32, block_budget, vmem_cap, small_vmem)
        if out3 is not None:
            out = jnp.mean(out3.reshape(B, g, D), axis=1).astype(h.dtype)
            return out.reshape(out_shape)
        # fall through to the unfolded path on (pathological) tiling failure

    h3 = h.reshape(B, N, D)                 # zero-copy: no moveaxis / HBM transpose
    out3 = _mean_pool_3d(h3, h.dtype, block_budget, vmem_cap, small_vmem)
    if out3 is None:                        # pathological tiling: let XLA handle it
        return jnp.mean(h, axis=pd, keepdims=True)
    return out3.reshape(out_shape)


# --------------------------------------------------------------------------
# Demo / self-test
# --------------------------------------------------------------------------
if __name__ == "__main__":
    key = jax.random.PRNGKey(0)
    # Typical CNP encoder output: (batch, num_context, hidden)
    B, N, D = 2, 16, 32
    h = jax.random.normal(key, (B, N, D), dtype=jnp.float32)

    # Case 1: pool over the context-points axis (lane-dense fold path, D<128)
    out1 = jax.block_until_ready(
        mean_pooling(h, None, None, pooling_dim=1, min_pallas_bytes=0))
    ref1 = jnp.mean(h, axis=1, keepdims=True)
    assert out1.shape == (B, 1, D), out1.shape
    assert jnp.allclose(out1, ref1, atol=1e-5, rtol=1e-5)

    # Case 2: module default pooling_dim=0 (lane axis becomes N*D, lane-dense)
    out0 = jax.block_until_ready(
        mean_pooling(h, None, None, pooling_dim=0, min_pallas_bytes=0))
    ref0 = jnp.mean(h, axis=0, keepdims=True)
    assert out0.shape == (1, N, D), out0.shape
    assert jnp.allclose(out0, ref0, atol=1e-5, rtol=1e-5)

    # Case 3: ragged pooled axis (full-extent sublane block, single-pass kernel)
    hr = jax.random.normal(jax.random.PRNGKey(1), (2, 13, 32), dtype=jnp.float32)
    outr = jax.block_until_ready(
        mean_pooling(hr, None, None, pooling_dim=1, min_pallas_bytes=0))
    refr = jnp.mean(hr, axis=1, keepdims=True)
    assert outr.shape == (2, 1, 32), outr.shape
    assert jnp.allclose(outr, refr, atol=1e-5, rtol=1e-5)

    # Case 4: bf16 input, fp32 accumulation in the kernel
    hb = jax.random.normal(jax.random.PRNGKey(2), (2, 16, 32)).astype(jnp.bfloat16)
    outb = jax.block_until_ready(
        mean_pooling(hb, None, None, pooling_dim=1, min_pallas_bytes=0))
    refb = jnp.mean(hb.astype(jnp.float32), axis=1, keepdims=True)
    assert outb.shape == (2, 1, 32), outb.shape
    assert jnp.allclose(outb.astype(jnp.float32), refb, atol=2e-2, rtol=2e-2)

    # Case 5: larger input through the default budget (single-block fast path,
    # >= 2 parallel blocks for megacore)
    hl = jax.random.normal(jax.random.PRNGKey(3), (8, 512, 256), dtype=jnp.float32)
    outl = jax.block_until_ready(mean_pooling(hl, None, None, pooling_dim=1))
    refl = jnp.mean(hl, axis=1, keepdims=True)
    assert outl.shape == (8, 1, 256), outl.shape
    assert jnp.allclose(outl, refl, atol=1e-5, rtol=1e-5)

    # Case 6: chunked-reduction path (forced small block budget), no mask
    hc = jax.random.normal(jax.random.PRNGKey(4), (2, 256, 128), dtype=jnp.float32)
    outc = jax.block_until_ready(
        mean_pooling(hc, None, None, pooling_dim=1,
                     min_pallas_bytes=0, block_budget_bytes=64 << 10))
    refc = jnp.mean(hc, axis=1, keepdims=True)
    assert outc.shape == (2, 1, 128), outc.shape
    assert jnp.allclose(outc, refc, atol=1e-5, rtol=1e-5)

    # Case 7: chunked reduction with a masked trailing partial block
    hm = jax.random.normal(jax.random.PRNGKey(5), (2, 200, 128), dtype=jnp.float32)
    outm = jax.block_until_ready(
        mean_pooling(hm, None, None, pooling_dim=1,
                     min_pallas_bytes=0, block_budget_bytes=64 << 10))
    refm = jnp.mean(hm, axis=1, keepdims=True)
    assert outm.shape == (2, 1, 128), outm.shape
    assert jnp.allclose(outm, refm, atol=1e-5, rtol=1e-5)

    # Case 8: tiny-input bypass (fused XLA reduce), same semantics
    outt = jax.block_until_ready(mean_pooling(h, None, None, pooling_dim=1))
    assert jnp.allclose(outt, ref1, atol=1e-5, rtol=1e-5)

    print("KERNEL_OK")
</pallas_src>

<mosaic_0001>
module attributes {stable_mosaic.version = 11 : i64} {
  func.func @_mean_pool_single_kernel(%arg0: i32, %arg1: i32, %arg2: memref<1x4x128xf32, #tpu.memory_space<vmem>>, %arg3: memref<1x1x128xf32, #tpu.memory_space<vmem>>) attributes {dimension_semantics = [#tpu.dimension_semantics<parallel>, #tpu.dimension_semantics<parallel>], iteration_bounds = array<i64: 2, 1>, scalar_prefetch = 0 : i64, scratch_operands = 0 : i64, tpu.core_type = #tpu.core_type<tc>, window_params = [{transform_indices = @transform_0, window_bounds = array<i64: 1, 4, 128>}, {transform_indices = @transform_1, window_bounds = array<i64: 1, 1, 128>}]} {
    %c0 = arith.constant 0 : index
    %c0_0 = arith.constant 0 : index
    %c0_1 = arith.constant 0 : index
    %0 = vector.load %arg2[%c0, %c0_0, %c0_1] : memref<1x4x128xf32, #tpu.memory_space<vmem>>, vector<1x4x128xf32>
    %cst = arith.constant dense<0.000000e+00> : vector<1x128xf32>
    %1 = vector.multi_reduction <add>, %0, %cst [1] : vector<1x4x128xf32> to vector<1x128xf32>
    %2 = vector.shape_cast %1 : vector<1x128xf32> to vector<1x1x128xf32>
    %cst_2 = arith.constant 2.500000e-01 : f32
    %3 = vector.broadcast %cst_2 : f32 to vector<1x1x128xf32>
    %4 = arith.mulf %2, %3 : vector<1x1x128xf32>
    %c0_3 = arith.constant 0 : index
    %c0_4 = arith.constant 0 : index
    %c0_5 = arith.constant 0 : index
    %5 = vector.load %arg3[%c0_3, %c0_4, %c0_5] : memref<1x1x128xf32, #tpu.memory_space<vmem>>, vector<1x1x128xf32>
    tpu.vector_store %arg3[%c0_3, %c0_4, %c0_5], %4 {strides = array<i32>} : memref<1x1x128xf32, #tpu.memory_space<vmem>>, vector<1x1x128xf32>,
    return
  }
  func.func @transform_0(%arg0: i32, %arg1: i32) -> (i32, i32, i32) {
    %c0_i32 = arith.constant 0 : i32
    %c0_i32_0 = arith.constant 0 : i32
    return %arg0, %c0_i32, %arg1 : i32, i32, i32
  }
  func.func @transform_1(%arg0: i32, %arg1: i32) -> (i32, i32, i32) {
    %c0_i32 = arith.constant 0 : i32
    %c0_i32_0 = arith.constant 0 : i32
    return %arg0, %c0_i32, %arg1 : i32, i32, i32
  }
}

</mosaic_0001>

<llo_original>
// kernel: tpu_custom_call.1
$region0: #{tpu_custom_call.1}
  #allocation0 [shape = 'u32[]', space=smem, size = 0x4, offset = 0x4, fixed_abs, tag = 'smem constant byte address 0x4 - core index']
  #allocation1 [shape = 'u32[144,128]{1,0:T(1,128)}', space=vmem, size = 0x12000, scoped, tag = 'internal scratch']
  %s0 = inlined_call_operand.hbm [shape: f32[2,4,128], index: 0, kind: input, shape index: {}]
  %s1 = inlined_call_operand.hbm [shape: f32[2,1,128], index: 1, kind: output, shape index: {}]
  %s2 = sld [smem:[#allocation0]]
  $region41: #{tpu_custom_call.1} parent=0
    _
  %s4 = ssub.s32 1, %s2
  %s5 = scalar_select 0, %s4, %s2
  $region1: #{tpu_custom_call.1} parent=0
    #allocation2 [shape = 'u8[4096]{0}', space=vmem, size = 0x1000, scoped, tag = 'input window, operand 0']
    #allocation3 [shape = 's32[2]{0}', space=sflag, size = 0x8, scoped, tag = 'scoped memory for tpu_custom_call.1']
    #allocation4 [shape = 's32[2]{0}', space=sflag, size = 0x8, scoped, tag = 'scoped memory for tpu_custom_call.1']
    #allocation5 [shape = 'u8[1024]{0}', space=vmem, size = 0x400, scoped, tag = 'output window, operand 0']
    %6 = vsyncpa [#allocation3], 0
    %s7 = scalar_lea.sflag [#allocation3], 1
    %8 = vsyncpa %s7, 0
    %9 = vsyncpa [#allocation4], 0
    %s10 = scalar_lea.sflag [#allocation4], 1
    %11 = vsyncpa %s10, 0
    loop: start=0, step=1, limit=4
    $region2: #{tpu_custom_call.1} parent=1 // loop_pre_header
      _
    $region3: #{tpu_custom_call.1} parent=1 // loop_header
      %s13 = sphi 0, %s17
      %p14 = scmp.ge.s32.totalorder %s13, 4
      %s20 = sphi 0, %s32
      %s21 = sphi 0, %s28
      %s22 = sphi 0, %s20
      %s23 = sphi 0, %s21
      %s24 = sphi 0, %s22
      %s25 = sphi 0, %s23
      %s37 = sphi 0, %s39
      %s40 = sphi 0, %s37
      %s41 = sphi 0, %s40
      %s57 = sphi 0, %s41
      %s65 = sphi 0, %s67
      %s68 = sphi 0, %s65
      %s69 = sphi 0, %s68
      %s85 = sphi 0, %s69
    $region4: #{tpu_custom_call.1} parent=1 // loop_header_branch
      %16 = sbr.rel (%p14) target = $region8
    $region5: #{tpu_custom_call.1} parent=1 // loop_body
      %s18 = ssub.s32 %s13, 1
      %s19 = ssub.s32 %s13, 2
      %s26 = sadd.s32 1, %s21
      %p27 = scmp.ge.s32.totalorder %s26, 1
      %s28 = scalar_select %p27, 0, %s26
      %s29 = sadd.s32 1, %s20
      %s30 = scalar_select %p27, %s29, %s20
      %p31 = scmp.ge.s32.totalorder %s30, 2
      %s32 = scalar_select %p31, 0, %s30
      %s33 = ssub.s32 %s20, %s32
      %s34 = ssub.s32 %s21, %s28
      %s35 = sor.u32 %s33, %s34
      %p36 = scmp.eq.s32.totalorder %s35, 0
      %s38 = sadd.s32 %s37, 1
      %s39 = scalar_select %p36, %s37, %s38
      %p42 = pneg %p36
      %p43 = scmp.eq.s32.totalorder %s13, 1
      %p44 = por %p42, %p43
      %p45 = scmp.ne.s32.totalorder %s37, %s40
      %p46 = scmp.eq.s32.totalorder %s13, 0
      %p47 = por %p45, %p46
      %p48 = scmp.ne.s32.totalorder %s37, %s40
      %p49 = scmp.eq.s32.totalorder %s18, 1
      %p50 = por %p48, %p49
      %p51 = scmp.ne.s32.totalorder %s40, %s41
      %p52 = scmp.eq.s32.totalorder %s18, 0
      %p53 = por %p51, %p52
      %p54 = scmp.ne.s32.totalorder %s40, %s41
      %p55 = scmp.eq.s32.totalorder %s19, 1
      %p56 = por %p54, %p55
      %p58 = scmp.ne.s32.totalorder %s41, %s57
      %p59 = scmp.eq.s32.totalorder %s19, 0
      %p60 = por %p58, %p59
      %s61 = ssub.s32 %s20, %s32
      %s62 = ssub.s32 %s21, %s28
      %s63 = sor.u32 %s61, %s62
      %p64 = scmp.eq.s32.totalorder %s63, 0
      %s66 = sadd.s32 %s65, 1
      %s67 = scalar_select %p64, %s65, %s66
      %p70 = pneg %p64
      %p71 = scmp.eq.s32.totalorder %s13, 1
      %p72 = por %p70, %p71
      %p73 = scmp.ne.s32.totalorder %s65, %s68
      %p74 = scmp.eq.s32.totalorder %s13, 0
      %p75 = por %p73, %p74
      %p76 = scmp.ne.s32.totalorder %s65, %s68
      %p77 = scmp.eq.s32.totalorder %s18, 1
      %p78 = por %p76, %p77
      %p79 = scmp.ne.s32.totalorder %s68, %s69
      %p80 = scmp.eq.s32.totalorder %s18, 0
      %p81 = por %p79, %p80
      %p82 = scmp.ne.s32.totalorder %s68, %s69
      %p83 = scmp.eq.s32.totalorder %s19, 1
      %p84 = por %p82, %p83
      %p86 = scmp.ne.s32.totalorder %s69, %s85
      %p87 = scmp.eq.s32.totalorder %s19, 0
      %p88 = por %p86, %p87
      %p89 = scmp.le.s32.totalorder 1, %s13
      %p90 = scmp.lt.s32.totalorder %s13, 3
      %p91 = pnand %p89, %p90
      %p92 = pneg %p91
      // Predicated region
      $region9: #{tpu_custom_call.1} parent=5 // pred_check
        _
      $region10: #{tpu_custom_call.1} parent=5 // pred_check_branch
        %94 = sbr.rel (%p91) target = $region12
      $region11: #{tpu_custom_call.1} parent=5 // pred_region
        %s95 = ssub.s32 %s13, 1
      $region12: #{tpu_custom_call.1} parent=5 // pred_fallthru
        _
      %p96 = scmp.lt.s32.totalorder %s13, 2
      // Predicated region
      $region13: #{tpu_custom_call.1} parent=5 // pred_check
        %p97 = pneg %p96
      $region14: #{tpu_custom_call.1} parent=5 // pred_check_branch
        %99 = sbr.rel (%p97) target = $region16
      $region15: #{tpu_custom_call.1} parent=5 // pred_region
        // Predicated region
        $region17: #{tpu_custom_call.1} parent=15 // pred_check
          %p100 = pneg %p47
        $region18: #{tpu_custom_call.1} parent=15 // pred_check_branch
          %102 = sbr.rel (%p100) target = $region20
        $region19: #{tpu_custom_call.1} parent=15 // pred_region
          %s103 = sand.u32 %s37, 1
          %s104 = scalar_lea.sflag [#allocation3], %s103
          %s105 = sand.u32 %s37, 1
          %s106 = smul.addr %s105, 4
          %s107 = scalar_lea.vmem [#allocation2], %s106
          %s109 = ssub.s32 64, 64
          %110 = vsyncadd %s104, %s109
          %s111 = sadd.s32 %s21, %s20
          %s112 = smul.addr %s111, 64
          %s113 = scalar_lea.hbm %s0, %s112
          %s115 = sshll.u32 %s107, 4
          %s116 = int_to_ptr.vmem [resolvable:$true] %s115
          %118 = dma.hbm_to_vmem [thread:$0]  %s113, 64, %s116, %s104
        $region20: #{tpu_custom_call.1} parent=15 // pred_fallthru
          _
      $region16: #{tpu_custom_call.1} parent=5 // pred_fallthru
        _
      %p119 = scmp.le.s32.totalorder 1, %s13
      %p120 = scmp.lt.s32.totalorder %s13, 3
      %p121 = pnand %p119, %p120
      %p122 = pneg %p121
      // Predicated region
      $region21: #{tpu_custom_call.1} parent=5 // pred_check
        _
      $region22: #{tpu_custom_call.1} parent=5 // pred_check_branch
        %124 = sbr.rel (%p121) target = $region24
      $region23: #{tpu_custom_call.1} parent=5 // pred_region
        %s125 = ssub.s32 %s13, 1
        %s126 = sand.u32 %s40, 1
        %s127 = scalar_lea.sflag [#allocation3], %s126
        %s128 = sand.u32 %s40, 1
        %s129 = smul.addr %s128, 4
        %s130 = scalar_lea.vmem [#allocation2], %s129
        // Predicated region
        $region25: #{tpu_custom_call.1} parent=23 // pred_check
          %p131 = pneg %p53
        $region26: #{tpu_custom_call.1} parent=23 // pred_check_branch
          %133 = sbr.rel (%p131) target = $region28
        $region27: #{tpu_custom_call.1} parent=23 // pred_region
          %134 = dma.done %s127, 64
        $region28: #{tpu_custom_call.1} parent=23 // pred_fallthru
          _
        %s135 = sand.u32 %s40, 1
        %s136 = scalar_lea.sflag [#allocation3], %s135
        %s137 = sand.u32 %s40, 1
        %s138 = smul.addr %s137, 4
        %s139 = scalar_lea.vmem [#allocation2], %s138
        %p140 = pneg %p53
        %p141 = pneg %p50
        %p142 = pneg %p81
        %p143 = pneg %p78
        %s144 = sand.u32 %s68, 1
        %s145 = scalar_lea.sflag [#allocation4], %s144
        %s146 = sand.u32 %s68, 1
        %s147 = scalar_lea.vmem [#allocation5], %s146
        %v148 = vld [vmem:[%s130] sm:$0xf]
        %vm149 = vcmask 1043456
        %v150 = vsel %vm149, %v148, 0.0
        %v151 = vrot.slane %v150, 4
        %v152 = vadd.f32 %v150, %v151
        %v153 = vrot.slane %v152, 2
        %v154 = vadd.f32 %v152, %v153
        %v155 = vrot.slane %v154, 1
        %v156 = vadd.f32 %v154, %v155
        %v157 = vmul.f32 %v156, 0.25
        %158 = vst [vmem:[%s147] sm:$0x1] %v157
        %s159 = sand.u32 %s68, 1
        %s160 = scalar_lea.sflag [#allocation4], %s159
        %s161 = sand.u32 %s68, 1
        %s162 = scalar_lea.vmem [#allocation5], %s161
        // Predicated region
        $region29: #{tpu_custom_call.1} parent=23 // pred_check
          %p163 = pneg %p78
        $region30: #{tpu_custom_call.1} parent=23 // pred_check_branch
          %165 = sbr.rel (%p163) target = $region32
        $region31: #{tpu_custom_call.1} parent=23 // pred_region
          %s167 = ssub.s32 16, 16
          %168 = vsyncadd %s160, %s167
          %s169 = sadd.s32 %s23, %s22
          %s170 = smul.addr %s169, 16
          %s171 = scalar_lea.hbm %s1, %s170
          %s173 = sshll.u32 %s162, 4
          %s174 = int_to_ptr.vmem [resolvable:$true] %s173
          %176 = dma.vmem_to_hbm [thread:$0]  %s174, 16, %s171, %s160
        $region32: #{tpu_custom_call.1} parent=23 // pred_fallthru
          _
      $region24: #{tpu_custom_call.1} parent=5 // pred_fallthru
        _
      %p177 = scmp.le.s32.totalorder 2, %s13
      // Predicated region
      $region33: #{tpu_custom_call.1} parent=5 // pred_check
        %p178 = pneg %p177
      $region34: #{tpu_custom_call.1} parent=5 // pred_check_branch
        %180 = sbr.rel (%p178) target = $region36
      $region35: #{tpu_custom_call.1} parent=5 // pred_region
        %s181 = ssub.s32 %s13, 2
        // Predicated region
        $region37: #{tpu_custom_call.1} parent=35 // pred_check
          %p182 = pneg %p84
        $region38: #{tpu_custom_call.1} parent=35 // pred_check_branch
          %184 = sbr.rel (%p182) target = $region40
        $region39: #{tpu_custom_call.1} parent=35 // pred_region
          %s185 = sand.u32 %s69, 1
          %s186 = scalar_lea.sflag [#allocation4], %s185
          %s187 = sand.u32 %s69, 1
          %s188 = scalar_lea.vmem [#allocation5], %s187
          %189 = dma.done %s186, 16
        $region40: #{tpu_custom_call.1} parent=35 // pred_fallthru
          _
      $region36: #{tpu_custom_call.1} parent=5 // pred_fallthru
        _
    $region6: #{tpu_custom_call.1} parent=1 // loop_footer
      %s17 = sadd.s32 1, %s13
    $region7: #{tpu_custom_call.1} parent=1 // loop_footer_branch
      %12 = sbr.rel target = $region3
    $region8: #{tpu_custom_call.1} parent=1 // loop_exit
      _
    %190 = vsyncpa [#allocation3], 1
    %s191 = scalar_lea.sflag [#allocation3], 1
    %192 = vsyncpa %s191, 1
    %193 = vsyncpa [#allocation4], 1
    %s194 = scalar_lea.sflag [#allocation4], 1
    %195 = vsyncpa %s194, 1

</llo_original>
